<compile_context>
chip_gen: v7x
topology: tpu7x:2x2x1
jax: 0.10.0
libtpu: 0.0.40
codegen_flags: <defaults>
</compile_context>

<pallas_src>
import functools

import jax
import jax.numpy as jnp
import numpy as np
from jax.experimental import pallas as pl
from jax.experimental.pallas import tpu as pltpu

HID = 64        # true hidden width of the MLP
HID_PAD = 128   # hidden width padded to a full lane register
OUT = 2         # true output width (softmax over dim=0 of these 2 columns)
OUT_PAD = 128   # lane-dense padded output width
BIAS_ROWS = 8   # each bias gets an 8-sublane-aligned slot in the packed slab


def _padded_input_dim(d):
    return ((d + 127) // 128) * 128


def _param_offsets(dp):
    """Static row offsets of each tensor inside the packed (R,128) slab."""
    off_w1 = 0
    off_b1 = off_w1 + dp
    off_w2 = off_b1 + BIAS_ROWS
    off_b2 = off_w2 + HID_PAD
    off_w3 = off_b2 + BIAS_ROWS
    off_b3 = off_w3 + HID_PAD
    off_w4 = off_b3 + BIAS_ROWS
    off_b4 = off_w4 + HID_PAD
    total = off_b4 + BIAS_ROWS
    return (off_w1, off_b1, off_w2, off_b2, off_w3, off_b3, off_w4, off_b4), total


def _pad2(a, rows, cols):
    r, c = a.shape
    return jnp.pad(a, ((0, rows - r), (0, cols - c)))


def pack_params(params, input_dim):
    """Pack w1..w4, b1..b4 into one (R,128) f32, 8x128-aligned VMEM slab."""
    dp = _padded_input_dim(input_dim)
    slab = jnp.concatenate([
        _pad2(params["w1"], dp, HID_PAD),
        _pad2(params["b1"], BIAS_ROWS, HID_PAD),
        _pad2(params["w2"], HID_PAD, HID_PAD),
        _pad2(params["b2"], BIAS_ROWS, HID_PAD),
        _pad2(params["w3"], HID_PAD, HID_PAD),
        _pad2(params["b3"], BIAS_ROWS, HID_PAD),
        _pad2(params["w4"], HID_PAD, OUT_PAD),
        _pad2(params["b4"], BIAS_ROWS, OUT_PAD),
    ], axis=0).astype(jnp.float32)
    return slab


def _mlp_softmax0_kernel(x_ref, p_ref, o_ref, *, dp, offs):
    """One problem per grid step: x (B, dp) -> softmax(dim=0) weights (B, 128)."""
    ow1, ob1, ow2, ob2, ow3, ob3, ow4, ob4 = offs

    def dense(h, w_off, w_rows, b_off):
        w = p_ref[w_off:w_off + w_rows, :]        # static, aligned slab views
        b = p_ref[b_off:b_off + 1, :]
        return jnp.dot(h, w, preferred_element_type=jnp.float32) + b

    x = x_ref[...]
    h = jnp.maximum(dense(x, ow1, dp, ob1), 0.0)
    h = jnp.maximum(dense(h, ow2, HID_PAD, ob2), 0.0)
    h = jnp.maximum(dense(h, ow3, HID_PAD, ob3), 0.0)
    logits = dense(h, ow4, HID_PAD, ob4)          # real logits in cols [0, 2)

    # Softmax over dim=0 (batch axis), exactly as nn.Softmax(dim=0).
    m = jnp.max(logits, axis=0, keepdims=True)
    e = jnp.exp(logits - m)
    s = jnp.sum(e, axis=0, keepdims=True)
    o_ref[...] = (e * pl.reciprocal(s, approx=True)).astype(o_ref.dtype)


def one_hot_cost_allocator(x, packed_params, input_dim):
    """x: (B, D) for a single problem, or (P, B, D) for P independent problems.

    Returns the module's cost weights: softmax over the B axis of the final
    2-wide linear layer, shape (B, 2) or (P, B, 2).
    """
    squeeze = x.ndim == 2
    if squeeze:
        x = x[None]
    P, B, D = x.shape
    dp = _padded_input_dim(input_dim)
    offs, total_rows = _param_offsets(dp)
    assert packed_params.shape == (total_rows, OUT_PAD)

    # Lane-dense input slab (zero-padded features).
    x_pad = jnp.pad(x.astype(jnp.float32), ((0, 0), (0, 0), (0, dp - D)))

    kernel = functools.partial(_mlp_softmax0_kernel, dp=dp, offs=offs)
    out = pl.pallas_call(
        kernel,
        out_shape=jax.ShapeDtypeStruct((P, B, OUT_PAD), jnp.float32),
        grid=(P,),
        in_specs=[
            # one problem per grid step; leading dim squeezed out of the ref
            pl.BlockSpec((None, B, dp), lambda p: (p, 0, 0)),
            # packed params: constant block index -> single DMA, stays resident
            pl.BlockSpec((total_rows, OUT_PAD), lambda p: (0, 0)),
        ],
        out_specs=pl.BlockSpec((None, B, OUT_PAD), lambda p: (p, 0, 0)),
        compiler_params=pltpu.CompilerParams(
            dimension_semantics=("parallel",)),   # megacore sharding on v7x
    )(x_pad, packed_params)

    out = out[:, :, :OUT]
    return out[0] if squeeze else out


def init_params(key, input_dim):
    """Deterministic synthetic init (uniform, roughly kaiming-scaled).

    Weights stored as (in_features, out_features): kernel computes x @ W + b,
    equivalent to PyTorch's x @ W_pt.T + b.  Biases are (1, out_features).
    """
    dims = [(input_dim, HID), (HID, HID), (HID, HID), (HID, OUT)]
    params = {}
    for i, (fan_in, fan_out) in enumerate(dims, start=1):
        key, kw, kb = jax.random.split(key, 3)
        bound = 1.0 / np.sqrt(fan_in)
        params[f"w{i}"] = jax.random.uniform(
            kw, (fan_in, fan_out), jnp.float32, -bound, bound)
        params[f"b{i}"] = jax.random.uniform(
            kb, (1, fan_out), jnp.float32, -bound, bound)
    return params


def _reference(x, p):
    """Pure-JAX reference: works for (B, D) or (P, B, D); softmax over B axis."""
    h = jnp.maximum(x @ p["w1"] + p["b1"], 0.0)
    h = jnp.maximum(h @ p["w2"] + p["b2"], 0.0)
    h = jnp.maximum(h @ p["w3"] + p["b3"], 0.0)
    logits = h @ p["w4"] + p["b4"]
    return jax.nn.softmax(logits, axis=-2)


if __name__ == "__main__":
    key = jax.random.PRNGKey(0)
    key, kx = jax.random.split(key)

    P, B, D = 4, 8, 16         # 4 independent problems, 8 state-cost rows, 16 features
    x_batched = jax.random.normal(kx, (P, B, D), jnp.float32)
    params = init_params(key, D)
    packed = pack_params(params, D)   # pack once, reuse for every call

    # Batched path: P independent problems, one pallas_call, grid over P.
    out_b = jax.block_until_ready(one_hot_cost_allocator(x_batched, packed, D))
    ref_b = _reference(x_batched, params)
    np.testing.assert_allclose(np.asarray(out_b), np.asarray(ref_b),
                               rtol=1e-3, atol=1e-3)
    # Softmax over dim=0 of each problem => columns sum to 1.
    np.testing.assert_allclose(np.asarray(out_b).sum(axis=1),
                               np.ones((P, OUT), np.float32),
                               rtol=1e-3, atol=1e-3)

    # Single-problem path: identical semantics to the module forward on (B, D).
    x_single = x_batched[0]
    out_s = jax.block_until_ready(one_hot_cost_allocator(x_single, packed, D))
    ref_s = _reference(x_single, params)
    np.testing.assert_allclose(np.asarray(out_s), np.asarray(ref_s),
                               rtol=1e-3, atol=1e-3)

    print("KERNEL_OK")
</pallas_src>

<mosaic_0001>
module attributes {stable_mosaic.version = 11 : i64} {
  func.func @_mlp_softmax0_kernel(%arg0: i32, %arg1: memref<1x8x128xf32, #tpu.memory_space<vmem>>, %arg2: memref<544x128xf32, #tpu.memory_space<vmem>>, %arg3: memref<1x8x128xf32, #tpu.memory_space<vmem>>) attributes {dimension_semantics = [#tpu.dimension_semantics<parallel>], iteration_bounds = array<i64: 4>, scalar_prefetch = 0 : i64, scratch_operands = 0 : i64, tpu.core_type = #tpu.core_type<tc>, window_params = [{transform_indices = @transform_0, window_bounds = array<i64: 1, 8, 128>}, {pipeline_mode = #tpu.pipeline_mode<synchronous>, transform_indices = @transform_1, window_bounds = array<i64: 544, 128>}, {transform_indices = @transform_2, window_bounds = array<i64: 1, 8, 128>}]} {
    %c0 = arith.constant 0 : index
    %c0_0 = arith.constant 0 : index
    %c0_1 = arith.constant 0 : index
    %0 = vector.load %arg1[%c0, %c0_0, %c0_1] : memref<1x8x128xf32, #tpu.memory_space<vmem>>, vector<1x8x128xf32>
    %1 = vector.shape_cast %0 : vector<1x8x128xf32> to vector<8x128xf32>
    %c0_2 = arith.constant 0 : index
    %c0_3 = arith.constant 0 : index
    %2 = vector.load %arg2[%c0_2, %c0_3] : memref<544x128xf32, #tpu.memory_space<vmem>>, vector<128x128xf32>
    %c128 = arith.constant 128 : index
    %c0_4 = arith.constant 0 : index
    %3 = vector.load %arg2[%c128, %c0_4] : memref<544x128xf32, #tpu.memory_space<vmem>>, vector<1x128xf32>
    %cst = arith.constant dense<0.000000e+00> : vector<8x128xf32>
    %4 = tpu.matmul %1, %2, %cst {dimension_numbers = #tpu.dot_dimension_numbers<[1], [0], [0], [1], [0, 0, 1, 1], [], []>} : vector<8x128xf32>, vector<128x128xf32>, vector<8x128xf32> -> vector<8x128xf32>
    %5 = vector.broadcast %3 : vector<1x128xf32> to vector<8x128xf32>
    %6 = arith.addf %4, %5 : vector<8x128xf32>
    %cst_5 = arith.constant 0.000000e+00 : f32
    %7 = vector.broadcast %cst_5 : f32 to vector<8x128xf32>
    %8 = arith.maximumf %6, %7 : vector<8x128xf32>
    %c136 = arith.constant 136 : index
    %c0_6 = arith.constant 0 : index
    %9 = vector.load %arg2[%c136, %c0_6] : memref<544x128xf32, #tpu.memory_space<vmem>>, vector<128x128xf32>
    %c264 = arith.constant 264 : index
    %c0_7 = arith.constant 0 : index
    %10 = vector.load %arg2[%c264, %c0_7] : memref<544x128xf32, #tpu.memory_space<vmem>>, vector<1x128xf32>
    %cst_8 = arith.constant dense<0.000000e+00> : vector<8x128xf32>
    %11 = tpu.matmul %8, %9, %cst_8 {dimension_numbers = #tpu.dot_dimension_numbers<[1], [0], [0], [1], [0, 0, 1, 1], [], []>} : vector<8x128xf32>, vector<128x128xf32>, vector<8x128xf32> -> vector<8x128xf32>
    %12 = vector.broadcast %10 : vector<1x128xf32> to vector<8x128xf32>
    %13 = arith.addf %11, %12 : vector<8x128xf32>
    %cst_9 = arith.constant 0.000000e+00 : f32
    %14 = vector.broadcast %cst_9 : f32 to vector<8x128xf32>
    %15 = arith.maximumf %13, %14 : vector<8x128xf32>
    %c272 = arith.constant 272 : index
    %c0_10 = arith.constant 0 : index
    %16 = vector.load %arg2[%c272, %c0_10] : memref<544x128xf32, #tpu.memory_space<vmem>>, vector<128x128xf32>
    %c400 = arith.constant 400 : index
    %c0_11 = arith.constant 0 : index
    %17 = vector.load %arg2[%c400, %c0_11] : memref<544x128xf32, #tpu.memory_space<vmem>>, vector<1x128xf32>
    %cst_12 = arith.constant dense<0.000000e+00> : vector<8x128xf32>
    %18 = tpu.matmul %15, %16, %cst_12 {dimension_numbers = #tpu.dot_dimension_numbers<[1], [0], [0], [1], [0, 0, 1, 1], [], []>} : vector<8x128xf32>, vector<128x128xf32>, vector<8x128xf32> -> vector<8x128xf32>
    %19 = vector.broadcast %17 : vector<1x128xf32> to vector<8x128xf32>
    %20 = arith.addf %18, %19 : vector<8x128xf32>
    %cst_13 = arith.constant 0.000000e+00 : f32
    %21 = vector.broadcast %cst_13 : f32 to vector<8x128xf32>
    %22 = arith.maximumf %20, %21 : vector<8x128xf32>
    %c408 = arith.constant 408 : index
    %c0_14 = arith.constant 0 : index
    %23 = vector.load %arg2[%c408, %c0_14] : memref<544x128xf32, #tpu.memory_space<vmem>>, vector<128x128xf32>
    %c536 = arith.constant 536 : index
    %c0_15 = arith.constant 0 : index
    %24 = vector.load %arg2[%c536, %c0_15] : memref<544x128xf32, #tpu.memory_space<vmem>>, vector<1x128xf32>
    %cst_16 = arith.constant dense<0.000000e+00> : vector<8x128xf32>
    %25 = tpu.matmul %22, %23, %cst_16 {dimension_numbers = #tpu.dot_dimension_numbers<[1], [0], [0], [1], [0, 0, 1, 1], [], []>} : vector<8x128xf32>, vector<128x128xf32>, vector<8x128xf32> -> vector<8x128xf32>
    %26 = vector.broadcast %24 : vector<1x128xf32> to vector<8x128xf32>
    %27 = arith.addf %25, %26 : vector<8x128xf32>
    %cst_17 = arith.constant dense<0xFF800000> : vector<128xf32>
    %28 = vector.multi_reduction <maximumf>, %27, %cst_17 [0] : vector<8x128xf32> to vector<128xf32>
    %29 = vector.shape_cast %28 : vector<128xf32> to vector<1x128xf32>
    %30 = vector.broadcast %29 : vector<1x128xf32> to vector<8x128xf32>
    %31 = arith.subf %27, %30 : vector<8x128xf32>
    %32 = math.exp %31 : vector<8x128xf32>
    %cst_18 = arith.constant dense<0.000000e+00> : vector<128xf32>
    %33 = vector.multi_reduction <add>, %32, %cst_18 [0] : vector<8x128xf32> to vector<128xf32>
    %34 = vector.shape_cast %33 : vector<128xf32> to vector<1x128xf32>
    %35 = tpu.reciprocal %34 {approx = true} : vector<1x128xf32> -> vector<1x128xf32>
    %36 = vector.broadcast %35 : vector<1x128xf32> to vector<8x128xf32>
    %37 = arith.mulf %32, %36 : vector<8x128xf32>
    %c0_19 = arith.constant 0 : index
    %c0_20 = arith.constant 0 : index
    %c0_21 = arith.constant 0 : index
    %38 = vector.load %arg3[%c0_19, %c0_20, %c0_21] : memref<1x8x128xf32, #tpu.memory_space<vmem>>, vector<1x8x128xf32>
    %39 = vector.shape_cast %38 : vector<1x8x128xf32> to vector<8x128xf32>
    %40 = vector.shape_cast %37 : vector<8x128xf32> to vector<1x8x128xf32>
    tpu.vector_store %arg3[%c0_19, %c0_20, %c0_21], %40 {strides = array<i32>} : memref<1x8x128xf32, #tpu.memory_space<vmem>>, vector<1x8x128xf32>,
    return
  }
  func.func @transform_0(%arg0: i32) -> (i32, i32, i32) {
    %c0_i32 = arith.constant 0 : i32
    %c0_i32_0 = arith.constant 0 : i32
    %c0_i32_1 = arith.constant 0 : i32
    return %arg0, %c0_i32, %c0_i32_0 : i32, i32, i32
  }
  func.func @transform_1(%arg0: i32) -> (i32, i32) {
    %c0_i32 = arith.constant 0 : i32
    %c0_i32_0 = arith.constant 0 : i32
    %c0_i32_1 = arith.constant 0 : i32
    return %c0_i32, %c0_i32_0 : i32, i32
  }
  func.func @transform_2(%arg0: i32) -> (i32, i32, i32) {
    %c0_i32 = arith.constant 0 : i32
    %c0_i32_0 = arith.constant 0 : i32
    %c0_i32_1 = arith.constant 0 : i32
    return %arg0, %c0_i32, %c0_i32_0 : i32, i32, i32
  }
}

</mosaic_0001>

<llo_original>
// kernel: tpu_custom_call.1
$region0: #{tpu_custom_call.1}
  #allocation0 [shape = 'u32[]', space=smem, size = 0x4, offset = 0x4, fixed_abs, tag = 'smem constant byte address 0x4 - core index']
  #allocation1 [shape = 'u32[144,128]{1,0:T(1,128)}', space=vmem, size = 0x12000, scoped, tag = 'internal scratch']
  %s0 = inlined_call_operand.hbm [shape: f32[4,8,128], index: 0, kind: input, shape index: {}]
  %s1 = inlined_call_operand.hbm [shape: f32[544,128], index: 1, kind: input, shape index: {}]
  %s2 = inlined_call_operand.hbm [shape: f32[4,8,128], index: 2, kind: output, shape index: {}]
  %s3 = sld [smem:[#allocation0]]
  $region49: #{tpu_custom_call.1} parent=0
    _
  %s5 = ssub.s32 1, %s3
  %s6 = scalar_select 0, %s5, %s3
  $region1: #{tpu_custom_call.1} parent=0
    #allocation2 [shape = 'u8[8192]{0}', space=vmem, size = 0x2000, scoped, tag = 'input window, operand 0']
    #allocation3 [shape = 's32[2]{0}', space=sflag, size = 0x8, scoped, tag = 'scoped memory for tpu_custom_call.1']
    #allocation4 [shape = 's32[2]{0}', space=sflag, size = 0x8, scoped, tag = 'scoped memory for tpu_custom_call.1']
    #allocation5 [shape = 'u8[278528]{0}', space=vmem, size = 0x44000, scoped, tag = 'input window, operand 1, single buffered']
    #allocation6 [shape = 's32[1]{0}', space=sflag, size = 0x4, scoped, tag = 'scoped memory for tpu_custom_call.1']
    #allocation7 [shape = 'u8[8192]{0}', space=vmem, size = 0x2000, scoped, tag = 'output window, operand 0']
    %7 = vsyncpa [#allocation3], 0
    %s8 = scalar_lea.sflag [#allocation3], 1
    %9 = vsyncpa %s8, 0
    %10 = vsyncpa [#allocation6], 0
    %11 = vsyncpa [#allocation4], 0
    %s12 = scalar_lea.sflag [#allocation4], 1
    %13 = vsyncpa %s12, 0
    loop: start=0, step=1, limit=6
    $region2: #{tpu_custom_call.1} parent=1 // loop_pre_header
      _
    $region3: #{tpu_custom_call.1} parent=1 // loop_header
      %s15 = sphi 0, %s19
      %p16 = scmp.ge.s32.totalorder %s15, 6
      %s25 = sphi 0, %s27
      %s28 = sphi 0, %s25
      %s29 = sphi 0, %s28
      %s45 = sphi 0, %s29
      %s49 = sphi 0, %s49
      %s51 = sphi 0, %s49
      %s52 = sphi 0, %s51
      %s66 = sphi 0, %s52
      %s72 = sphi 0, %s74
      %s75 = sphi 0, %s72
      %s76 = sphi 0, %s75
      %s92 = sphi 0, %s76
    $region4: #{tpu_custom_call.1} parent=1 // loop_header_branch
      %18 = sbr.rel (%p16) target = $region8
    $region5: #{tpu_custom_call.1} parent=1 // loop_body
      %s20 = ssub.s32 %s15, 1
      %s21 = ssub.s32 %s15, 2
      %s22 = sadd.s32 %s15, 1
      %s23 = ssub.s32 %s15, %s22
      %p24 = scmp.eq.s32.totalorder %s23, 0
      %s26 = sadd.s32 %s25, 1
      %s27 = scalar_select %p24, %s25, %s26
      %p30 = pneg %p24
      %p31 = scmp.eq.s32.totalorder %s15, 3
      %p32 = por %p30, %p31
      %p33 = scmp.ne.s32.totalorder %s25, %s28
      %p34 = scmp.eq.s32.totalorder %s15, 0
      %p35 = por %p33, %p34
      %p36 = scmp.ne.s32.totalorder %s25, %s28
      %p37 = scmp.eq.s32.totalorder %s20, 3
      %p38 = por %p36, %p37
      %p39 = scmp.ne.s32.totalorder %s28, %s29
      %p40 = scmp.eq.s32.totalorder %s20, 0
      %p41 = por %p39, %p40
      %p42 = scmp.ne.s32.totalorder %s28, %s29
      %p43 = scmp.eq.s32.totalorder %s21, 3
      %p44 = por %p42, %p43
      %p46 = scmp.ne.s32.totalorder %s29, %s45
      %p47 = scmp.eq.s32.totalorder %s21, 0
      %p48 = por %p46, %p47
      %s50 = sadd.s32 %s49, 1
      %p53 = scmp.eq.s32.totalorder %s15, 3
      %p54 = scmp.ne.s32.totalorder %s49, %s51
      %p55 = scmp.eq.s32.totalorder %s15, 0
      %p56 = por %p54, %p55
      %p57 = scmp.ne.s32.totalorder %s49, %s51
      %p58 = scmp.eq.s32.totalorder %s20, 3
      %p59 = por %p57, %p58
      %p60 = scmp.ne.s32.totalorder %s51, %s52
      %p61 = scmp.eq.s32.totalorder %s20, 0
      %p62 = por %p60, %p61
      %p63 = scmp.ne.s32.totalorder %s51, %s52
      %p64 = scmp.eq.s32.totalorder %s21, 3
      %p65 = por %p63, %p64
      %p67 = scmp.ne.s32.totalorder %s52, %s66
      %p68 = scmp.eq.s32.totalorder %s21, 0
      %p69 = por %p67, %p68
      %s70 = ssub.s32 %s15, %s22
      %p71 = scmp.eq.s32.totalorder %s70, 0
      %s73 = sadd.s32 %s72, 1
      %s74 = scalar_select %p71, %s72, %s73
      %p77 = pneg %p71
      %p78 = scmp.eq.s32.totalorder %s15, 3
      %p79 = por %p77, %p78
      %p80 = scmp.ne.s32.totalorder %s72, %s75
      %p81 = scmp.eq.s32.totalorder %s15, 0
      %p82 = por %p80, %p81
      %p83 = scmp.ne.s32.totalorder %s72, %s75
      %p84 = scmp.eq.s32.totalorder %s20, 3
      %p85 = por %p83, %p84
      %p86 = scmp.ne.s32.totalorder %s75, %s76
      %p87 = scmp.eq.s32.totalorder %s20, 0
      %p88 = por %p86, %p87
      %p89 = scmp.ne.s32.totalorder %s75, %s76
      %p90 = scmp.eq.s32.totalorder %s21, 3
      %p91 = por %p89, %p90
      %p93 = scmp.ne.s32.totalorder %s76, %s92
      %p94 = scmp.eq.s32.totalorder %s21, 0
      %p95 = por %p93, %p94
      %p96 = scmp.le.s32.totalorder 1, %s15
      %p97 = scmp.lt.s32.totalorder %s15, 5
      %p98 = pnand %p96, %p97
      %p99 = pneg %p98
      // Predicated region
      $region9: #{tpu_custom_call.1} parent=5 // pred_check
        _
      $region10: #{tpu_custom_call.1} parent=5 // pred_check_branch
        %101 = sbr.rel (%p98) target = $region12
      $region11: #{tpu_custom_call.1} parent=5 // pred_region
        %s102 = ssub.s32 %s15, 1
        // Predicated region
        $region13: #{tpu_custom_call.1} parent=11 // pred_check
          %p103 = pneg %p62
        $region14: #{tpu_custom_call.1} parent=11 // pred_check_branch
          %105 = sbr.rel (%p103) target = $region16
        $region15: #{tpu_custom_call.1} parent=11 // pred_region
          %s107 = ssub.s32 8704, 8704
          %108 = vsyncadd [#allocation6], %s107
          %s109 = sshll.u32 [#allocation5], 4
          %s110 = int_to_ptr.vmem [resolvable:$true] %s109
          %115 = dma.hbm_to_vmem [thread:$0]  %s1, 8704, %s110, [#allocation6], 128, 128, 8
        $region16: #{tpu_custom_call.1} parent=11 // pred_fallthru
          _
      $region12: #{tpu_custom_call.1} parent=5 // pred_fallthru
        _
      %p116 = scmp.lt.s32.totalorder %s15, 4
      // Predicated region
      $region17: #{tpu_custom_call.1} parent=5 // pred_check
        %p117 = pneg %p116
      $region18: #{tpu_custom_call.1} parent=5 // pred_check_branch
        %119 = sbr.rel (%p117) target = $region20
      $region19: #{tpu_custom_call.1} parent=5 // pred_region
        // Predicated region
        $region21: #{tpu_custom_call.1} parent=19 // pred_check
          %p120 = pneg %p35
        $region22: #{tpu_custom_call.1} parent=19 // pred_check_branch
          %122 = sbr.rel (%p120) target = $region24
        $region23: #{tpu_custom_call.1} parent=19 // pred_region
          %s123 = sand.u32 %s25, 1
          %s124 = scalar_lea.sflag [#allocation3], %s123
          %s125 = sand.u32 %s25, 1
          %s126 = smul.addr %s125, 8
          %s127 = scalar_lea.vmem [#allocation2], %s126
          %s129 = ssub.s32 128, 128
          %130 = vsyncadd %s124, %s129
          %s131 = smul.addr %s15, 128
          %s132 = scalar_lea.hbm %s0, %s131
          %s134 = sshll.u32 %s127, 4
          %s135 = int_to_ptr.vmem [resolvable:$true] %s134
          %137 = dma.hbm_to_vmem [thread:$0]  %s132, 128, %s135, %s124
        $region24: #{tpu_custom_call.1} parent=19 // pred_fallthru
          _
      $region20: #{tpu_custom_call.1} parent=5 // pred_fallthru
        _
      %p138 = scmp.le.s32.totalorder 1, %s15
      %p139 = scmp.lt.s32.totalorder %s15, 5
      %p140 = pnand %p138, %p139
      %p141 = pneg %p140
      // Predicated region
      $region25: #{tpu_custom_call.1} parent=5 // pred_check
        _
      $region26: #{tpu_custom_call.1} parent=5 // pred_check_branch
        %143 = sbr.rel (%p140) target = $region28
      $region27: #{tpu_custom_call.1} parent=5 // pred_region
        %s144 = ssub.s32 %s15, 1
        %s145 = sand.u32 %s28, 1
        %s146 = scalar_lea.sflag [#allocation3], %s145
        %s147 = sand.u32 %s28, 1
        %s148 = smul.addr %s147, 8
        %s149 = scalar_lea.vmem [#allocation2], %s148
        // Predicated region
        $region29: #{tpu_custom_call.1} parent=27 // pred_check
          %p150 = pneg %p41
        $region30: #{tpu_custom_call.1} parent=27 // pred_check_branch
          %152 = sbr.rel (%p150) target = $region32
        $region31: #{tpu_custom_call.1} parent=27 // pred_region
          %153 = dma.done %s146, 128
        $region32: #{tpu_custom_call.1} parent=27 // pred_fallthru
          _
        // Predicated region
        $region33: #{tpu_custom_call.1} parent=27 // pred_check
          %p154 = pneg %p62
        $region34: #{tpu_custom_call.1} parent=27 // pred_check_branch
          %156 = sbr.rel (%p154) target = $region36
        $region35: #{tpu_custom_call.1} parent=27 // pred_region
          %157 = dma.done [#allocation6], 8704
        $region36: #{tpu_custom_call.1} parent=27 // pred_fallthru
          _
        %s158 = sand.u32 %s28, 1
        %s159 = scalar_lea.sflag [#allocation3], %s158
        %s160 = sand.u32 %s28, 1
        %s161 = smul.addr %s160, 8
        %s162 = scalar_lea.vmem [#allocation2], %s161
        %p163 = pneg %p41
        %p164 = pneg %p38
        %p165 = pneg %p62
        %p166 = pneg %p59
        %p167 = pneg %p88
        %p168 = pneg %p85
        %s169 = sand.u32 %s75, 1
        %s170 = scalar_lea.sflag [#allocation4], %s169
        %s171 = sand.u32 %s75, 1
        %s172 = smul.addr %s171, 8
        %s173 = scalar_lea.vmem [#allocation7], %s172
        %v174 = vld [vmem:[%s149] sm:$0xff]
        %v175 = vld [vmem:[#allocation5] sm:$0xff]
        %v176 = vld [vmem:[#allocation5 + $0x8] sm:$0xff]
        %v177 = vld [vmem:[#allocation5 + $0x10] sm:$0xff]
        %v178 = vld [vmem:[#allocation5 + $0x18] sm:$0xff]
        %v179 = vld [vmem:[#allocation5 + $0x20] sm:$0xff]
        %v180 = vld [vmem:[#allocation5 + $0x28] sm:$0xff]
        %v181 = vld [vmem:[#allocation5 + $0x30] sm:$0xff]
        %v182 = vld [vmem:[#allocation5 + $0x38] sm:$0xff]
        %v183 = vld [vmem:[#allocation5 + $0x40] sm:$0xff]
        %v184 = vld [vmem:[#allocation5 + $0x48] sm:$0xff]
        %v185 = vld [vmem:[#allocation5 + $0x50] sm:$0xff]
        %v186 = vld [vmem:[#allocation5 + $0x58] sm:$0xff]
        %v187 = vld [vmem:[#allocation5 + $0x60] sm:$0xff]
        %v188 = vld [vmem:[#allocation5 + $0x68] sm:$0xff]
        %v189 = vld [vmem:[#allocation5 + $0x70] sm:$0xff]
        %v190 = vld [vmem:[#allocation5 + $0x78] sm:$0xff]
        %v191 = vld [vmem:[#allocation5 + $0x80] sm:$0x1]
        %v192 = vlaneseq
        %v193 = vshrl.u32 %v192, 7
        %v194 = vsub.s32 0, %v193
        %v195 = vrot.slane %v191, %v194
        %196 = vmatprep.subr.mxu0 0.0
        %197 = vmatpush1.msra.mxu0 %v175
        %198 = vmatprep.subr.mxu0 0.0
        %199 = vmatpush1.msra.mxu0 %v176
        %200 = vmatprep.subr.mxu0 0.0
        %201 = vmatpush1.msra.mxu0 %v177
        %202 = vmatprep.subr.mxu0 0.0
        %203 = vmatpush1.msra.mxu0 %v178
        %204 = vmatprep.subr.mxu0 0.0
        %205 = vmatpush1.msra.mxu0 %v179
        %206 = vmatprep.subr.mxu0 0.0
        %207 = vmatpush1.msra.mxu0 %v180
        %208 = vmatprep.subr.mxu0 0.0
        %209 = vmatpush1.msra.mxu0 %v181
        %210 = vmatprep.subr.mxu0 0.0
        %211 = vmatpush1.msra.mxu0 %v182
        %212 = vmatprep.subr.mxu0 0.0
        %213 = vmatpush1.msra.mxu0 %v183
        %214 = vmatprep.subr.mxu0 0.0
        %215 = vmatpush1.msra.mxu0 %v184
        %216 = vmatprep.subr.mxu0 0.0
        %217 = vmatpush1.msra.mxu0 %v185
        %218 = vmatprep.subr.mxu0 0.0
        %219 = vmatpush1.msra.mxu0 %v186
        %220 = vmatprep.subr.mxu0 0.0
        %221 = vmatpush1.msra.mxu0 %v187
        %222 = vmatprep.subr.mxu0 0.0
        %223 = vmatpush1.msra.mxu0 %v188
        %224 = vmatprep.subr.mxu0 0.0
        %225 = vmatpush1.msra.mxu0 %v189
        %226 = vmatprep.subr.mxu0 0.0
        %227 = vmatpush1.msra.mxu0 %v190
        %228 = vmatprep.subr.mxu0 0.0
        %229 = vmatpush1.msra.mxu0 0.0
        %230 = vmatprep.subr.mxu0 0.0
        %231 = vmatpush1.msra.mxu0 0.0
        %232 = vmatprep.subr.mxu0 0.0
        %233 = vmatpush1.msra.mxu0 0.0
        %234 = vmatprep.subr.mxu0 0.0
        %235 = vmatpush1.msra.mxu0 0.0
        %236 = vmatprep.subr.mxu0 0.0
        %237 = vmatpush1.msra.mxu0 0.0
        %238 = vmatprep.subr.mxu0 0.0
        %239 = vmatpush1.msra.mxu0 0.0
        %240 = vmatprep.subr.mxu0 0.0
        %241 = vmatpush1.msra.mxu0 0.0
        %242 = vmatprep.subr.mxu0 0.0
        %243 = vmatpush1.msra.mxu0 0.0
        %244 = vmatprep.subr.mxu0 0.0
        %245 = vmatpush1.msra.mxu0 0.0
        %246 = vmatprep.subr.mxu0 0.0
        %247 = vmatpush1.msra.mxu0 0.0
        %248 = vmatprep.subr.mxu0 0.0
        %249 = vmatpush1.msra.mxu0 0.0
        %250 = vmatprep.subr.mxu0 0.0
        %251 = vmatpush1.msra.mxu0 0.0
        %252 = vmatprep.subr.mxu0 0.0
        %253 = vmatpush1.msra.mxu0 0.0
        %254 = vmatprep.subr.mxu0 0.0
        %255 = vmatpush1.msra.mxu0 0.0
        %256 = vmatprep.subr.mxu0 0.0
        %257 = vmatpush1.msra.mxu0 0.0
        %258 = vmatprep.subr.mxu0 0.0
        %259 = vmatpush1.msra.mxu0 0.0
        %260 = vmatprep.mubr.f32.mxu0 0.0
        %261 = vmatmul.mubr.f32.gmra.mrb[0].mxu0 %v174
        %v262 = vpop.f32.mrb[0].mxu0
        %v263 = vadd.f32 %v195, %v262
        %v264 = vpop.f32.mrb[0].mxu0
        %265 = vdwg.mxu0
        %v266 = vmax.f32 %v263, 0.0
        %v267 = vld [vmem:[#allocation5 + $0x88] sm:$0xff]
        %v268 = vld [vmem:[#allocation5 + $0x90] sm:$0xff]
        %v269 = vld [vmem:[#allocation5 + $0x98] sm:$0xff]
        %v270 = vld [vmem:[#allocation5 + $0xa0] sm:$0xff]
        %v271 = vld [vmem:[#allocation5 + $0xa8] sm:$0xff]
        %v272 = vld [vmem:[#allocation5 + $0xb0] sm:$0xff]
        %v273 = vld [vmem:[#allocation5 + $0xb8] sm:$0xff]
        %v274 = vld [vmem:[#allocation5 + $0xc0] sm:$0xff]
        %v275 = vld [vmem:[#allocation5 + $0xc8] sm:$0xff]
        %v276 = vld [vmem:[#allocation5 + $0xd0] sm:$0xff]
        %v277 = vld [vmem:[#allocation5 + $0xd8] sm:$0xff]
        %v278 = vld [vmem:[#allocation5 + $0xe0] sm:$0xff]
        %v279 = vld [vmem:[#allocation5 + $0xe8] sm:$0xff]
        %v280 = vld [vmem:[#allocation5 + $0xf0] sm:$0xff]
        %v281 = vld [vmem:[#allocation5 + $0xf8] sm:$0xff]
        %v282 = vld [vmem:[#allocation5 + $0x100] sm:$0xff]
        %v283 = vld [vmem:[#allocation5 + $0x108] sm:$0x1]
        %v284 = vlaneseq
        %v285 = vshrl.u32 %v284, 7
        %v286 = vsub.s32 0, %v285
        %v287 = vrot.slane %v283, %v286
        %288 = vmatprep.subr.mxu0 0.0
        %289 = vmatpush1.msra.mxu0 %v267
        %290 = vmatprep.subr.mxu0 0.0
        %291 = vmatpush1.msra.mxu0 %v268
        %292 = vmatprep.subr.mxu0 0.0
        %293 = vmatpush1.msra.mxu0 %v269
        %294 = vmatprep.subr.mxu0 0.0
        %295 = vmatpush1.msra.mxu0 %v270
        %296 = vmatprep.subr.mxu0 0.0
        %297 = vmatpush1.msra.mxu0 %v271
        %298 = vmatprep.subr.mxu0 0.0
        %299 = vmatpush1.msra.mxu0 %v272
        %300 = vmatprep.subr.mxu0 0.0
        %301 = vmatpush1.msra.mxu0 %v273
        %302 = vmatprep.subr.mxu0 0.0
        %303 = vmatpush1.msra.mxu0 %v274
        %304 = vmatprep.subr.mxu0 0.0
        %305 = vmatpush1.msra.mxu0 %v275
        %306 = vmatprep.subr.mxu0 0.0
        %307 = vmatpush1.msra.mxu0 %v276
        %308 = vmatprep.subr.mxu0 0.0
        %309 = vmatpush1.msra.mxu0 %v277
        %310 = vmatprep.subr.mxu0 0.0
        %311 = vmatpush1.msra.mxu0 %v278
        %312 = vmatprep.subr.mxu0 0.0
        %313 = vmatpush1.msra.mxu0 %v279
        %314 = vmatprep.subr.mxu0 0.0
        %315 = vmatpush1.msra.mxu0 %v280
        %316 = vmatprep.subr.mxu0 0.0
        %317 = vmatpush1.msra.mxu0 %v281
        %318 = vmatprep.subr.mxu0 0.0
        %319 = vmatpush1.msra.mxu0 %v282
        %320 = vmatprep.subr.mxu0 0.0
        %321 = vmatpush1.msra.mxu0 0.0
        %322 = vmatprep.subr.mxu0 0.0
        %323 = vmatpush1.msra.mxu0 0.0
        %324 = vmatprep.subr.mxu0 0.0
        %325 = vmatpush1.msra.mxu0 0.0
        %326 = vmatprep.subr.mxu0 0.0
        %327 = vmatpush1.msra.mxu0 0.0
        %328 = vmatprep.subr.mxu0 0.0
        %329 = vmatpush1.msra.mxu0 0.0
        %330 = vmatprep.subr.mxu0 0.0
        %331 = vmatpush1.msra.mxu0 0.0
        %332 = vmatprep.subr.mxu0 0.0
        %333 = vmatpush1.msra.mxu0 0.0
        %334 = vmatprep.subr.mxu0 0.0
        %335 = vmatpush1.msra.mxu0 0.0
        %336 = vmatprep.subr.mxu0 0.0
        %337 = vmatpush1.msra.mxu0 0.0
        %338 = vmatprep.subr.mxu0 0.0
        %339 = vmatpush1.msra.mxu0 0.0
        %340 = vmatprep.subr.mxu0 0.0
        %341 = vmatpush1.msra.mxu0 0.0
        %342 = vmatprep.subr.mxu0 0.0
        %343 = vmatpush1.msra.mxu0 0.0
        %344 = vmatprep.subr.mxu0 0.0
        %345 = vmatpush1.msra.mxu0 0.0
        %346 = vmatprep.subr.mxu0 0.0
        %347 = vmatpush1.msra.mxu0 0.0
        %348 = vmatprep.subr.mxu0 0.0
        %349 = vmatpush1.msra.mxu0 0.0
        %350 = vmatprep.subr.mxu0 0.0
        %351 = vmatpush1.msra.mxu0 0.0
        %352 = vmatprep.mubr.f32.mxu0 0.0
        %353 = vmatmul.mubr.f32.gmra.mrb[0].mxu0 %v266
        %v354 = vpop.f32.mrb[0].mxu0
        %v355 = vadd.f32 %v287, %v354
        %v356 = vpop.f32.mrb[0].mxu0
        %357 = vdwg.mxu0
        %v358 = vmax.f32 %v355, 0.0
        %v359 = vld [vmem:[#allocation5 + $0x110] sm:$0xff]
        %v360 = vld [vmem:[#allocation5 + $0x118] sm:$0xff]
        %v361 = vld [vmem:[#allocation5 + $0x120] sm:$0xff]
        %v362 = vld [vmem:[#allocation5 + $0x128] sm:$0xff]
        %v363 = vld [vmem:[#allocation5 + $0x130] sm:$0xff]
        %v364 = vld [vmem:[#allocation5 + $0x138] sm:$0xff]
        %v365 = vld [vmem:[#allocation5 + $0x140] sm:$0xff]
        %v366 = vld [vmem:[#allocation5 + $0x148] sm:$0xff]
        %v367 = vld [vmem:[#allocation5 + $0x150] sm:$0xff]
        %v368 = vld [vmem:[#allocation5 + $0x158] sm:$0xff]
        %v369 = vld [vmem:[#allocation5 + $0x160] sm:$0xff]
        %v370 = vld [vmem:[#allocation5 + $0x168] sm:$0xff]
        %v371 = vld [vmem:[#allocation5 + $0x170] sm:$0xff]
        %v372 = vld [vmem:[#allocation5 + $0x178] sm:$0xff]
        %v373 = vld [vmem:[#allocation5 + $0x180] sm:$0xff]
        %v374 = vld [vmem:[#allocation5 + $0x188] sm:$0xff]
        %v375 = vld [vmem:[#allocation5 + $0x190] sm:$0x1]
        %v376 = vlaneseq
        %v377 = vshrl.u32 %v376, 7
        %v378 = vsub.s32 0, %v377
        %v379 = vrot.slane %v375, %v378
        %380 = vmatprep.subr.mxu0 0.0
        %381 = vmatpush1.msra.mxu0 %v359
        %382 = vmatprep.subr.mxu0 0.0
        %383 = vmatpush1.msra.mxu0 %v360
        %384 = vmatprep.subr.mxu0 0.0
        %385 = vmatpush1.msra.mxu0 %v361
        %386 = vmatprep.subr.mxu0 0.0
        %387 = vmatpush1.msra.mxu0 %v362
        %388 = vmatprep.subr.mxu0 0.0
        %389 = vmatpush1.msra.mxu0 %v363
        %390 = vmatprep.subr.mxu0 0.0
        %391 = vmatpush1.msra.mxu0 %v364
        %392 = vmatprep.subr.mxu0 0.0
        %393 = vmatpush1.msra.mxu0 %v365
        %394 = vmatprep.subr.mxu0 0.0
        %395 = vmatpush1.msra.mxu0 %v366
        %396 = vmatprep.subr.mxu0 0.0
        %397 = vmatpush1.msra.mxu0 %v367
        %398 = vmatprep.subr.mxu0 0.0
        %399 = vmatpush1.msra.mxu0 %v368
        %400 = vmatprep.subr.mxu0 0.0
        %401 = vmatpush1.msra.mxu0 %v369
        %402 = vmatprep.subr.mxu0 0.0
        %403 = vmatpush1.msra.mxu0 %v370
        %404 = vmatprep.subr.mxu0 0.0
        %405 = vmatpush1.msra.mxu0 %v371
        %406 = vmatprep.subr.mxu0 0.0
        %407 = vmatpush1.msra.mxu0 %v372
        %408 = vmatprep.subr.mxu0 0.0
        %409 = vmatpush1.msra.mxu0 %v373
        %410 = vmatprep.subr.mxu0 0.0
        %411 = vmatpush1.msra.mxu0 %v374
        %412 = vmatprep.subr.mxu0 0.0
        %413 = vmatpush1.msra.mxu0 0.0
        %414 = vmatprep.subr.mxu0 0.0
        %415 = vmatpush1.msra.mxu0 0.0
        %416 = vmatprep.subr.mxu0 0.0
        %417 = vmatpush1.msra.mxu0 0.0
        %418 = vmatprep.subr.mxu0 0.0
        %419 = vmatpush1.msra.mxu0 0.0
        %420 = vmatprep.subr.mxu0 0.0
        %421 = vmatpush1.msra.mxu0 0.0
        %422 = vmatprep.subr.mxu0 0.0
        %423 = vmatpush1.msra.mxu0 0.0
        %424 = vmatprep.subr.mxu0 0.0
        %425 = vmatpush1.msra.mxu0 0.0
        %426 = vmatprep.subr.mxu0 0.0
        %427 = vmatpush1.msra.mxu0 0.0
        %428 = vmatprep.subr.mxu0 0.0
        %429 = vmatpush1.msra.mxu0 0.0
        %430 = vmatprep.subr.mxu0 0.0
        %431 = vmatpush1.msra.mxu0 0.0
        %432 = vmatprep.subr.mxu0 0.0
        %433 = vmatpush1.msra.mxu0 0.0
        %434 = vmatprep.subr.mxu0 0.0
        %435 = vmatpush1.msra.mxu0 0.0
        %436 = vmatprep.subr.mxu0 0.0
        %437 = vmatpush1.msra.mxu0 0.0
        %438 = vmatprep.subr.mxu0 0.0
        %439 = vmatpush1.msra.mxu0 0.0
        %440 = vmatprep.subr.mxu0 0.0
        %441 = vmatpush1.msra.mxu0 0.0
        %442 = vmatprep.subr.mxu0 0.0
        %443 = vmatpush1.msra.mxu0 0.0
        %444 = vmatprep.mubr.f32.mxu0 0.0
        %445 = vmatmul.mubr.f32.gmra.mrb[0].mxu0 %v358
        %v446 = vpop.f32.mrb[0].mxu0
        %v447 = vadd.f32 %v379, %v446
        %v448 = vpop.f32.mrb[0].mxu0
        %449 = vdwg.mxu0
        %v450 = vmax.f32 %v447, 0.0
        %v451 = vld [vmem:[#allocation5 + $0x198] sm:$0xff]
        %v452 = vld [vmem:[#allocation5 + $0x1a0] sm:$0xff]
        %v453 = vld [vmem:[#allocation5 + $0x1a8] sm:$0xff]
        %v454 = vld [vmem:[#allocation5 + $0x1b0] sm:$0xff]
        %v455 = vld [vmem:[#allocation5 + $0x1b8] sm:$0xff]
        %v456 = vld [vmem:[#allocation5 + $0x1c0] sm:$0xff]
        %v457 = vld [vmem:[#allocation5 + $0x1c8] sm:$0xff]
        %v458 = vld [vmem:[#allocation5 + $0x1d0] sm:$0xff]
        %v459 = vld [vmem:[#allocation5 + $0x1d8] sm:$0xff]
        %v460 = vld [vmem:[#allocation5 + $0x1e0] sm:$0xff]
        %v461 = vld [vmem:[#allocation5 + $0x1e8] sm:$0xff]
        %v462 = vld [vmem:[#allocation5 + $0x1f0] sm:$0xff]
        %v463 = vld [vmem:[#allocation5 + $0x1f8] sm:$0xff]
        %v464 = vld [vmem:[#allocation5 + $0x200] sm:$0xff]
        %v465 = vld [vmem:[#allocation5 + $0x208] sm:$0xff]
        %v466 = vld [vmem:[#allocation5 + $0x210] sm:$0xff]
        %v467 = vld [vmem:[#allocation5 + $0x218] sm:$0x1]
        %v468 = vlaneseq
        %v469 = vshrl.u32 %v468, 7
        %v470 = vsub.s32 0, %v469
        %v471 = vrot.slane %v467, %v470
        %472 = vmatprep.subr.mxu0 0.0
        %473 = vmatpush1.msra.mxu0 %v451
        %474 = vmatprep.subr.mxu0 0.0
        %475 = vmatpush1.msra.mxu0 %v452
        %476 = vmatprep.subr.mxu0 0.0
        %477 = vmatpush1.msra.mxu0 %v453
        %478 = vmatprep.subr.mxu0 0.0
        %479 = vmatpush1.msra.mxu0 %v454
        %480 = vmatprep.subr.mxu0 0.0
        %481 = vmatpush1.msra.mxu0 %v455
        %482 = vmatprep.subr.mxu0 0.0
        %483 = vmatpush1.msra.mxu0 %v456
        %484 = vmatprep.subr.mxu0 0.0
        %485 = vmatpush1.msra.mxu0 %v457
        %486 = vmatprep.subr.mxu0 0.0
        %487 = vmatpush1.msra.mxu0 %v458
        %488 = vmatprep.subr.mxu0 0.0
        %489 = vmatpush1.msra.mxu0 %v459
        %490 = vmatprep.subr.mxu0 0.0
        %491 = vmatpush1.msra.mxu0 %v460
        %492 = vmatprep.subr.mxu0 0.0
        %493 = vmatpush1.msra.mxu0 %v461
        %494 = vmatprep.subr.mxu0 0.0
        %495 = vmatpush1.msra.mxu0 %v462
        %496 = vmatprep.subr.mxu0 0.0
        %497 = vmatpush1.msra.mxu0 %v463
        %498 = vmatprep.subr.mxu0 0.0
        %499 = vmatpush1.msra.mxu0 %v464
        %500 = vmatprep.subr.mxu0 0.0
        %501 = vmatpush1.msra.mxu0 %v465
        %502 = vmatprep.subr.mxu0 0.0
        %503 = vmatpush1.msra.mxu0 %v466
        %504 = vmatprep.subr.mxu0 0.0
        %505 = vmatpush1.msra.mxu0 0.0
        %506 = vmatprep.subr.mxu0 0.0
        %507 = vmatpush1.msra.mxu0 0.0
        %508 = vmatprep.subr.mxu0 0.0
        %509 = vmatpush1.msra.mxu0 0.0
        %510 = vmatprep.subr.mxu0 0.0
        %511 = vmatpush1.msra.mxu0 0.0
        %512 = vmatprep.subr.mxu0 0.0
        %513 = vmatpush1.msra.mxu0 0.0
        %514 = vmatprep.subr.mxu0 0.0
        %515 = vmatpush1.msra.mxu0 0.0
        %516 = vmatprep.subr.mxu0 0.0
        %517 = vmatpush1.msra.mxu0 0.0
        %518 = vmatprep.subr.mxu0 0.0
        %519 = vmatpush1.msra.mxu0 0.0
        %520 = vmatprep.subr.mxu0 0.0
        %521 = vmatpush1.msra.mxu0 0.0
        %522 = vmatprep.subr.mxu0 0.0
        %523 = vmatpush1.msra.mxu0 0.0
        %524 = vmatprep.subr.mxu0 0.0
        %525 = vmatpush1.msra.mxu0 0.0
        %526 = vmatprep.subr.mxu0 0.0
        %527 = vmatpush1.msra.mxu0 0.0
        %528 = vmatprep.subr.mxu0 0.0
        %529 = vmatpush1.msra.mxu0 0.0
        %530 = vmatprep.subr.mxu0 0.0
        %531 = vmatpush1.msra.mxu0 0.0
        %532 = vmatprep.subr.mxu0 0.0
        %533 = vmatpush1.msra.mxu0 0.0
        %534 = vmatprep.subr.mxu0 0.0
        %535 = vmatpush1.msra.mxu0 0.0
        %536 = vmatprep.mubr.f32.mxu0 0.0
        %537 = vmatmul.mubr.f32.gmra.mrb[0].mxu0 %v450
        %v538 = vpop.f32.mrb[0].mxu0
        %v539 = vadd.f32 %v471, %v538
        %v540 = vpop.f32.mrb[0].mxu0
        %541 = vdwg.mxu0
        %v542 = vrot.slane %v539, 4
        %v543 = vmax.f32 %v539, %v542
        %v544 = vrot.slane %v543, 2
        %v545 = vmax.f32 %v543, %v544
        %v546 = vrot.slane %v545, 1
        %v547 = vmax.f32 %v545, %v546
        %v548 = vsub.f32 %v539, %v547
        %v549 = vmul.f32 %v548, 1.442695
        %v550 = vpow.pop %v549
        %v551 = vrot.slane %v550, 4
        %v552 = vadd.f32 %v550, %v551
        %v553 = vrot.slane %v552, 2
        %v554 = vadd.f32 %v552, %v553
        %v555 = vrot.slane %v554, 1
        %v556 = vadd.f32 %v554, %v555
        %v557 = vrcp.pop %v556
        %v558 = vmul.f32 %v550, %v557
        %559 = vst [vmem:[%s173] sm:$0xff] %v558
        %s560 = sand.u32 %s75, 1
        %s561 = scalar_lea.sflag [#allocation4], %s560
        %s562 = sand.u32 %s75, 1
        %s563 = smul.addr %s562, 8
        %s564 = scalar_lea.vmem [#allocation7], %s563
        // Predicated region
        $region37: #{tpu_custom_call.1} parent=27 // pred_check
          %p565 = pneg %p85
        $region38: #{tpu_custom_call.1} parent=27 // pred_check_branch
          %567 = sbr.rel (%p565) target = $region40
        $region39: #{tpu_custom_call.1} parent=27 // pred_region
          %s569 = ssub.s32 128, 128
          %570 = vsyncadd %s561, %s569
          %s571 = smul.addr %s20, 128
          %s572 = scalar_lea.hbm %s2, %s571
          %s574 = sshll.u32 %s564, 4
          %s575 = int_to_ptr.vmem [resolvable:$true] %s574
          %577 = dma.vmem_to_hbm [thread:$0]  %s575, 128, %s572, %s561
        $region40: #{tpu_custom_call.1} parent=27 // pred_fallthru
          _
      $region28: #{tpu_custom_call.1} parent=5 // pred_fallthru
        _
      %p578 = scmp.le.s32.totalorder 2, %s15
      // Predicated region
      $region41: #{tpu_custom_call.1} parent=5 // pred_check
        %p579 = pneg %p578
      $region42: #{tpu_custom_call.1} parent=5 // pred_check_branch
        %581 = sbr.rel (%p579) target = $region44
      $region43: #{tpu_custom_call.1} parent=5 // pred_region
        %s582 = ssub.s32 %s15, 2
        // Predicated region
        $region45: #{tpu_custom_call.1} parent=43 // pred_check
          %p583 = pneg %p91
        $region46: #{tpu_custom_call.1} parent=43 // pred_check_branch
          %585 = sbr.rel (%p583) target = $region48
        $region47: #{tpu_custom_call.1} parent=43 // pred_region
          %s586 = sand.u32 %s76, 1
          %s587 = scalar_lea.sflag [#allocation4], %s586
          %s588 = sand.u32 %s76, 1
          %s589 = smul.addr %s588, 8
          %s590 = scalar_lea.vmem [#allocation7], %s589
          %591 = dma.done %s587, 128
        $region48: #{tpu_custom_call.1} parent=43 // pred_fallthru
          _
      $region44: #{tpu_custom_call.1} parent=5 // pred_fallthru
        _
    $region6: #{tpu_custom_call.1} parent=1 // loop_footer
      %s19 = sadd.s32 1, %s15
    $region7: #{tpu_custom_call.1} parent=1 // loop_footer_branch
      %14 = sbr.rel target = $region3
    $region8: #{tpu_custom_call.1} parent=1 // loop_exit
      _
    %592 = vsyncpa [#allocation3], 1
    %s593 = scalar_lea.sflag [#allocation3], 1
    %594 = vsyncpa %s593, 1
    %595 = vsyncpa [#allocation6], 1
    %596 = vsyncpa [#allocation4], 1
    %s597 = scalar_lea.sflag [#allocation4], 1
    %598 = vsyncpa %s597, 1

</llo_original>
